<compile_context>
chip_gen: v7x
topology: tpu7x:2x2x1
jax: 0.10.0
libtpu: 0.0.40
codegen_flags: <defaults>
</compile_context>

<pallas_src>
from functools import partial

import jax
import jax.numpy as jnp
from jax.experimental import pallas as pl
from jax.experimental.pallas import tpu as pltpu


def _weight_drop_linear_kernel(*refs, threshold, inv_keep, apply_dropout):
    """Tiled fused (weight-dropout + linear) kernel.

    Grid = (Out//tn, In//tk); the In/reduction axis is the LAST grid axis.
    refs (apply_dropout=True ): x(B,tk), wT(tk,tn), bits(tk,tn) u32,
                                b(1,tn), o(B,tn), acc(B,tn) f32
    refs (apply_dropout=False): x(B,tk), wT(tk,tn), b(1,tn), o(B,tn), acc f32
    """
    if apply_dropout:
        x_ref, wt_ref, bits_ref, b_ref, o_ref, acc_ref = refs
    else:
        x_ref, wt_ref, b_ref, o_ref, acc_ref = refs

    k = pl.program_id(1)

    @pl.when(k == 0)
    def _():
        acc_ref[...] = jnp.zeros_like(acc_ref)

    w = wt_ref[...]
    if apply_dropout:
        # Bernoulli(keep_prob) mask via one uint32 threshold compare; the
        # 1/keep_prob inverted-dropout scale is applied on the small
        # (B, tn) output tile instead of on every weight element.
        keep = bits_ref[...] < jnp.uint32(threshold)
        w = jnp.where(keep, w, jnp.zeros_like(w))

    acc_ref[...] += jnp.dot(x_ref[...], w, preferred_element_type=jnp.float32)

    @pl.when(k == pl.num_programs(1) - 1)
    def _():
        y = acc_ref[...]
        if apply_dropout:
            y = y * jnp.float32(inv_keep)          # scale BEFORE bias add
        o_ref[...] = (y + b_ref[...].astype(jnp.float32)).astype(o_ref.dtype)


def weight_drop_linear(x, weight, bias, *, seed, dropout_p=0.5, training=True,
                       tn=256, tk=512):
    """Forward of WeightDrop(nn.Linear(In, Out), ['weight'], dropout=dropout_p).

    x: (B, In); weight: (Out, In) (PyTorch layout); bias: (Out,).
    """
    B, In = x.shape
    Out = weight.shape[0]

    tn = min(tn, Out)
    tk = min(tk, In)
    assert Out % tn == 0 and In % tk == 0, "Out/In must divide tile sizes"
    grid = (Out // tn, In // tk)

    apply_dropout = bool(training) and float(dropout_p) > 0.0
    keep_prob = 1.0 - float(dropout_p)
    threshold = min(int(keep_prob * (1 << 32)), (1 << 32) - 1)
    inv_keep = (1.0 / keep_prob) if apply_dropout else 1.0

    # Layout plumbing (outside the kernel, free): (Out, In) -> (In, Out) so
    # the kernel computes x @ wT with no in-kernel transpose.
    wt = weight.T
    bias2d = bias.reshape(1, Out)

    kernel = partial(_weight_drop_linear_kernel, threshold=threshold,
                     inv_keep=inv_keep, apply_dropout=apply_dropout)

    in_specs = [
        pl.BlockSpec((B, tk), lambda n, k: (0, k)),    # x
        pl.BlockSpec((tk, tn), lambda n, k: (k, n)),   # wT
    ]
    args = [x, wt]
    if apply_dropout:
        # One mask per forward call of the wrapped module (WeightDrop
        # semantics); bits are consumed tile-by-tile by the kernel.
        bits = jax.random.bits(jax.random.PRNGKey(seed), (In, Out),
                               dtype=jnp.uint32)
        in_specs.append(pl.BlockSpec((tk, tn), lambda n, k: (k, n)))
        args.append(bits)
    in_specs.append(pl.BlockSpec((1, tn), lambda n, k: (0, n)))   # bias
    args.append(bias2d)

    return pl.pallas_call(
        kernel,
        out_shape=jax.ShapeDtypeStruct((B, Out), x.dtype),
        grid_spec=pltpu.PrefetchScalarGridSpec(
            num_scalar_prefetch=0,
            grid=grid,
            in_specs=in_specs,
            out_specs=pl.BlockSpec((B, tn), lambda n, k: (0, n)),
            scratch_shapes=[pltpu.VMEM((B, tn), jnp.float32)],
        ),
        compiler_params=pltpu.CompilerParams(
            dimension_semantics=("parallel", "arbitrary")),
    )(*args)


if __name__ == "__main__":
    key = jax.random.PRNGKey(0)
    kx, kw, kb = jax.random.split(key, 3)

    # Small shapes consistent with wrapping nn.Linear(128, 128); batch = 8.
    B, In, Out = 8, 128, 128
    x = jax.random.normal(kx, (B, In), dtype=jnp.float32)

    # Deterministic synthetic init of the wrapped Linear's parameters
    # (PyTorch default: U(-1/sqrt(In), 1/sqrt(In))).
    bound = 1.0 / (In ** 0.5)
    weight = jax.random.uniform(kw, (Out, In), dtype=jnp.float32,
                                minval=-bound, maxval=bound)
    bias = jax.random.uniform(kb, (Out,), dtype=jnp.float32,
                              minval=-bound, maxval=bound)

    # Training-mode forward (weight dropout active), p = 0.5.
    y_train = weight_drop_linear(x, weight, bias, seed=0,
                                 dropout_p=0.5, training=True)
    jax.block_until_ready(y_train)

    # Eval-mode sanity check: with dropout disabled the kernel must match a
    # plain linear layer (up to fp tolerance).
    y_eval = weight_drop_linear(x, weight, bias, seed=0,
                                dropout_p=0.5, training=False)
    jax.block_until_ready(y_eval)
    y_ref = x @ weight.T + bias
    assert jnp.allclose(y_eval, y_ref, atol=1e-5, rtol=1e-5)

    assert y_train.shape == (B, Out) and y_train.dtype == x.dtype
    assert bool(jnp.all(jnp.isfinite(y_train)))

    print("KERNEL_OK")
</pallas_src>

<mosaic_0001>
module attributes {stable_mosaic.version = 11 : i64} {
  func.func @_weight_drop_linear_kernel(%arg0: i32, %arg1: i32, %arg2: memref<8x128xf32, #tpu.memory_space<vmem>>, %arg3: memref<128x128xf32, #tpu.memory_space<vmem>>, %arg4: memref<128x128xi32, #tpu.memory_space<vmem>>, %arg5: memref<1x128xf32, #tpu.memory_space<vmem>>, %arg6: memref<8x128xf32, #tpu.memory_space<vmem>>, %arg7: memref<8x128xf32, #tpu.memory_space<vmem>>) attributes {dimension_semantics = [#tpu.dimension_semantics<parallel>, #tpu.dimension_semantics<arbitrary>], iteration_bounds = array<i64: 1, 1>, scalar_prefetch = 0 : i64, scratch_operands = 1 : i64, tpu.core_type = #tpu.core_type<tc>, window_params = [{transform_indices = @transform_0, window_bounds = array<i64: 8, 128>}, {transform_indices = @transform_1, window_bounds = array<i64: 128, 128>}, {transform_indices = @transform_2, window_bounds = array<i64: 128, 128>}, {transform_indices = @transform_3, window_bounds = array<i64: 1, 128>}, {transform_indices = @transform_4, window_bounds = array<i64: 8, 128>}]} {
    %c0_i32 = arith.constant 0 : i32
    %0 = arith.cmpi eq, %arg1, %c0_i32 : i32
    %1 = arith.extui %0 : i1 to i32
    %c0_i32_0 = arith.constant 0 : i32
    %2 = arith.cmpi ne, %1, %c0_i32_0 : i32
    scf.if %2 {
      %cst_13 = arith.constant 0.000000e+00 : f32
      %17 = vector.broadcast %cst_13 : f32 to vector<8x128xf32>
      %c0_14 = arith.constant 0 : index
      %c0_15 = arith.constant 0 : index
      %18 = vector.load %arg7[%c0_14, %c0_15] : memref<8x128xf32, #tpu.memory_space<vmem>>, vector<8x128xf32>
      tpu.vector_store %arg7[%c0_14, %c0_15], %17 {strides = array<i32>} : memref<8x128xf32, #tpu.memory_space<vmem>>, vector<8x128xf32>,
    } else {
    }
    %c0 = arith.constant 0 : index
    %c0_1 = arith.constant 0 : index
    %3 = vector.load %arg3[%c0, %c0_1] : memref<128x128xf32, #tpu.memory_space<vmem>>, vector<128x128xf32>
    %c0_2 = arith.constant 0 : index
    %c0_3 = arith.constant 0 : index
    %4 = vector.load %arg4[%c0_2, %c0_3] : memref<128x128xi32, #tpu.memory_space<vmem>>, vector<128x128xi32>
    %c-2147483648_i32 = arith.constant -2147483648 : i32
    %5 = vector.broadcast %c-2147483648_i32 : i32 to vector<128x128xi32>
    %6 = arith.cmpi ult, %4, %5 : vector<128x128xi32>
    %cst = arith.constant 0.000000e+00 : f32
    %7 = vector.broadcast %cst : f32 to vector<128x128xf32>
    %8 = arith.select %6, %3, %7 : vector<128x128xi1>, vector<128x128xf32>
    %c0_4 = arith.constant 0 : index
    %c0_5 = arith.constant 0 : index
    %9 = vector.load %arg7[%c0_4, %c0_5] : memref<8x128xf32, #tpu.memory_space<vmem>>, vector<8x128xf32>
    %c0_6 = arith.constant 0 : index
    %c0_7 = arith.constant 0 : index
    %10 = vector.load %arg2[%c0_6, %c0_7] : memref<8x128xf32, #tpu.memory_space<vmem>>, vector<8x128xf32>
    %cst_8 = arith.constant dense<0.000000e+00> : vector<8x128xf32>
    %11 = tpu.matmul %10, %8, %cst_8 {dimension_numbers = #tpu.dot_dimension_numbers<[1], [0], [0], [1], [0, 0, 1, 1], [], []>} : vector<8x128xf32>, vector<128x128xf32>, vector<8x128xf32> -> vector<8x128xf32>
    %12 = arith.addf %9, %11 : vector<8x128xf32>
    %c0_9 = arith.constant 0 : index
    %c0_10 = arith.constant 0 : index
    %13 = vector.load %arg7[%c0_9, %c0_10] : memref<8x128xf32, #tpu.memory_space<vmem>>, vector<8x128xf32>
    tpu.vector_store %arg7[%c0_9, %c0_10], %12 {strides = array<i32>} : memref<8x128xf32, #tpu.memory_space<vmem>>, vector<8x128xf32>,
    %c0_i32_11 = arith.constant 0 : i32
    %14 = arith.cmpi eq, %arg1, %c0_i32_11 : i32
    %15 = arith.extui %14 : i1 to i32
    %c0_i32_12 = arith.constant 0 : i32
    %16 = arith.cmpi ne, %15, %c0_i32_12 : i32
    scf.if %16 {
      %c0_13 = arith.constant 0 : index
      %c0_14 = arith.constant 0 : index
      %17 = vector.load %arg7[%c0_13, %c0_14] : memref<8x128xf32, #tpu.memory_space<vmem>>, vector<8x128xf32>
      %cst_15 = arith.constant 2.000000e+00 : f32
      %18 = vector.broadcast %cst_15 : f32 to vector<8x128xf32>
      %19 = arith.mulf %17, %18 : vector<8x128xf32>
      %c0_16 = arith.constant 0 : index
      %c0_17 = arith.constant 0 : index
      %20 = vector.load %arg5[%c0_16, %c0_17] : memref<1x128xf32, #tpu.memory_space<vmem>>, vector<1x128xf32>
      %21 = vector.broadcast %20 : vector<1x128xf32> to vector<8x128xf32>
      %22 = arith.addf %19, %21 : vector<8x128xf32>
      %c0_18 = arith.constant 0 : index
      %c0_19 = arith.constant 0 : index
      %23 = vector.load %arg6[%c0_18, %c0_19] : memref<8x128xf32, #tpu.memory_space<vmem>>, vector<8x128xf32>
      tpu.vector_store %arg6[%c0_18, %c0_19], %22 {strides = array<i32>} : memref<8x128xf32, #tpu.memory_space<vmem>>, vector<8x128xf32>,
    } else {
    }
    return
  }
  func.func @transform_0(%arg0: i32, %arg1: i32) -> (i32, i32) {
    %c0_i32 = arith.constant 0 : i32
    %c0_i32_0 = arith.constant 0 : i32
    return %c0_i32, %arg1 : i32, i32
  }
  func.func @transform_1(%arg0: i32, %arg1: i32) -> (i32, i32) {
    %c0_i32 = arith.constant 0 : i32
    return %arg1, %arg0 : i32, i32
  }
  func.func @transform_2(%arg0: i32, %arg1: i32) -> (i32, i32) {
    %c0_i32 = arith.constant 0 : i32
    return %arg1, %arg0 : i32, i32
  }
  func.func @transform_3(%arg0: i32, %arg1: i32) -> (i32, i32) {
    %c0_i32 = arith.constant 0 : i32
    %c0_i32_0 = arith.constant 0 : i32
    return %c0_i32, %arg0 : i32, i32
  }
  func.func @transform_4(%arg0: i32, %arg1: i32) -> (i32, i32) {
    %c0_i32 = arith.constant 0 : i32
    %c0_i32_0 = arith.constant 0 : i32
    return %c0_i32, %arg0 : i32, i32
  }
}

</mosaic_0001>

<llo_original>
// kernel: tpu_custom_call.1
$region0: #{tpu_custom_call.1}
  #allocation0 [shape = 'u32[]', space=smem, size = 0x4, offset = 0x4, fixed_abs, tag = 'smem constant byte address 0x4 - core index']
  #allocation1 [shape = 'u32[144,128]{1,0:T(1,128)}', space=vmem, size = 0x12000, scoped, tag = 'internal scratch']
  #allocation2 [shape = 'f32[8,128]{1,0:T(8,128)}', space=vmem, size = 0x1000, scoped, tag = 'scratch operand']
  %s0 = inlined_call_operand.hbm [shape: f32[8,128], index: 0, kind: input, shape index: {}]
  %s1 = inlined_call_operand.hbm [shape: f32[128,128], index: 1, kind: input, shape index: {}]
  %s2 = inlined_call_operand.hbm [shape: u32[128,128], index: 2, kind: input, shape index: {}]
  %s3 = inlined_call_operand.vmem [shape: f32[1,128], index: 3, kind: input, shape index: {}]
  %s4 = inlined_call_operand.hbm [shape: f32[8,128], index: 4, kind: output, shape index: {}]
  %s5 = sld [smem:[#allocation0]]
  $region46: #{tpu_custom_call.1} parent=0
    _
  %s7 = ssub.s32 1, %s5
  %s8 = scalar_select 0, %s7, %s5
  $region1: #{tpu_custom_call.1} parent=0
    #allocation3 [shape = 'u8[4096]{0}', space=vmem, size = 0x1000, scoped, tag = 'input window, operand 0, single buffered']
    #allocation4 [shape = 's32[1]{0}', space=sflag, size = 0x4, scoped, tag = 'scoped memory for tpu_custom_call.1']
    #allocation5 [shape = 's32[1]{0}', space=sflag, size = 0x4, scoped, tag = 'scoped memory for tpu_custom_call.1']
    #allocation6 [shape = 'u8[65536]{0}', space=vmem, size = 0x10000, scoped, tag = 'input window, operand 1, single buffered']
    #allocation7 [shape = 's32[1]{0}', space=sflag, size = 0x4, scoped, tag = 'scoped memory for tpu_custom_call.1']
    #allocation8 [shape = 'u8[65536]{0}', space=vmem, size = 0x10000, scoped, tag = 'input window, operand 2, single buffered']
    #allocation9 [shape = 'u8[4096]{0}', space=vmem, size = 0x1000, scoped, tag = 'output window, operand 0, single buffered']
    %9 = vsyncpa [#allocation4], 0
    %10 = vsyncpa [#allocation7], 0
    %11 = vsyncpa [#allocation5], 0
    // Predicated region
    $region2: #{tpu_custom_call.1} parent=1 // pred_check
      _
    $region3: #{tpu_custom_call.1} parent=1 // pred_check_branch
      %13 = sbr.rel (0) target = $region5
    $region4: #{tpu_custom_call.1} parent=1 // pred_region
      %s15 = ssub.s32 128, 128
      %16 = vsyncadd [#allocation4], %s15
      %s18 = sshll.u32 [#allocation3], 4
      %s19 = int_to_ptr.vmem [resolvable:$true] %s18
      %21 = dma.hbm_to_vmem [thread:$0]  %s0, 128, %s19, [#allocation4]
    $region5: #{tpu_custom_call.1} parent=1 // pred_fallthru
      _
    // Predicated region
    $region6: #{tpu_custom_call.1} parent=1 // pred_check
      _
    $region7: #{tpu_custom_call.1} parent=1 // pred_check_branch
      %23 = sbr.rel (0) target = $region9
    $region8: #{tpu_custom_call.1} parent=1 // pred_region
      %s25 = ssub.s32 2048, 2048
      %26 = vsyncadd [#allocation7], %s25
      %s27 = sshll.u32 [#allocation6], 4
      %s28 = int_to_ptr.vmem [resolvable:$true] %s27
      %33 = dma.hbm_to_vmem [thread:$0]  %s1, 2048, %s28, [#allocation7], 128, 128, 8
    $region9: #{tpu_custom_call.1} parent=1 // pred_fallthru
      _
    // Predicated region
    $region10: #{tpu_custom_call.1} parent=1 // pred_check
      _
    $region11: #{tpu_custom_call.1} parent=1 // pred_check_branch
      %35 = sbr.rel (0) target = $region13
    $region12: #{tpu_custom_call.1} parent=1 // pred_region
      %s37 = ssub.s32 2048, 2048
      %38 = vsyncadd [#allocation7], %s37
      %s39 = sshll.u32 [#allocation8], 4
      %s40 = int_to_ptr.vmem [resolvable:$true] %s39
      %45 = dma.hbm_to_vmem [thread:$0]  %s2, 2048, %s40, [#allocation7], 128, 128, 8
    $region13: #{tpu_custom_call.1} parent=1 // pred_fallthru
      _
    // Predicated region
    $region14: #{tpu_custom_call.1} parent=1 // pred_check
      _
    $region15: #{tpu_custom_call.1} parent=1 // pred_check_branch
      %47 = sbr.rel (0) target = $region17
    $region16: #{tpu_custom_call.1} parent=1 // pred_region
      _
    $region17: #{tpu_custom_call.1} parent=1 // pred_fallthru
      _
    // Predicated region
    $region18: #{tpu_custom_call.1} parent=1 // pred_check
      _
    $region19: #{tpu_custom_call.1} parent=1 // pred_check_branch
      %49 = sbr.rel (0) target = $region21
    $region20: #{tpu_custom_call.1} parent=1 // pred_region
      %50 = dma.done [#allocation4], 128
    $region21: #{tpu_custom_call.1} parent=1 // pred_fallthru
      _
    // Predicated region
    $region22: #{tpu_custom_call.1} parent=1 // pred_check
      _
    $region23: #{tpu_custom_call.1} parent=1 // pred_check_branch
      %52 = sbr.rel (0) target = $region25
    $region24: #{tpu_custom_call.1} parent=1 // pred_region
      %53 = dma.done [#allocation7], 2048
    $region25: #{tpu_custom_call.1} parent=1 // pred_fallthru
      _
    // Predicated region
    $region26: #{tpu_custom_call.1} parent=1 // pred_check
      _
    $region27: #{tpu_custom_call.1} parent=1 // pred_check_branch
      %55 = sbr.rel (0) target = $region29
    $region28: #{tpu_custom_call.1} parent=1 // pred_region
      %56 = dma.done [#allocation7], 2048
    $region29: #{tpu_custom_call.1} parent=1 // pred_fallthru
      _
    %p57 = scmp.eq.s32.totalorder 0, 0
    // Predicated region
    $region30: #{tpu_custom_call.1} parent=1 // pred_check
      %p58 = pneg %p57
    $region31: #{tpu_custom_call.1} parent=1 // pred_check_branch
      %60 = sbr.rel (%p58) target = $region33
    $region32: #{tpu_custom_call.1} parent=1 // pred_region
      %61 = vst [vmem:[#allocation2] sm:$0xff] 0.0
    $region33: #{tpu_custom_call.1} parent=1 // pred_fallthru
      _
    %v62 = vld [vmem:[#allocation6] sm:$0xff]
    %v63 = vld [vmem:[#allocation6 + $0x8] sm:$0xff]
    %v64 = vld [vmem:[#allocation6 + $0x10] sm:$0xff]
    %v65 = vld [vmem:[#allocation6 + $0x18] sm:$0xff]
    %v66 = vld [vmem:[#allocation6 + $0x20] sm:$0xff]
    %v67 = vld [vmem:[#allocation6 + $0x28] sm:$0xff]
    %v68 = vld [vmem:[#allocation6 + $0x30] sm:$0xff]
    %v69 = vld [vmem:[#allocation6 + $0x38] sm:$0xff]
    %v70 = vld [vmem:[#allocation6 + $0x40] sm:$0xff]
    %v71 = vld [vmem:[#allocation6 + $0x48] sm:$0xff]
    %v72 = vld [vmem:[#allocation6 + $0x50] sm:$0xff]
    %v73 = vld [vmem:[#allocation6 + $0x58] sm:$0xff]
    %v74 = vld [vmem:[#allocation6 + $0x60] sm:$0xff]
    %v75 = vld [vmem:[#allocation6 + $0x68] sm:$0xff]
    %v76 = vld [vmem:[#allocation6 + $0x70] sm:$0xff]
    %v77 = vld [vmem:[#allocation6 + $0x78] sm:$0xff]
    %v78 = vld [vmem:[#allocation8] sm:$0xff]
    %v79 = vld [vmem:[#allocation8 + $0x8] sm:$0xff]
    %v80 = vld [vmem:[#allocation8 + $0x10] sm:$0xff]
    %v81 = vld [vmem:[#allocation8 + $0x18] sm:$0xff]
    %v82 = vld [vmem:[#allocation8 + $0x20] sm:$0xff]
    %v83 = vld [vmem:[#allocation8 + $0x28] sm:$0xff]
    %v84 = vld [vmem:[#allocation8 + $0x30] sm:$0xff]
    %v85 = vld [vmem:[#allocation8 + $0x38] sm:$0xff]
    %v86 = vld [vmem:[#allocation8 + $0x40] sm:$0xff]
    %v87 = vld [vmem:[#allocation8 + $0x48] sm:$0xff]
    %v88 = vld [vmem:[#allocation8 + $0x50] sm:$0xff]
    %v89 = vld [vmem:[#allocation8 + $0x58] sm:$0xff]
    %v90 = vld [vmem:[#allocation8 + $0x60] sm:$0xff]
    %v91 = vld [vmem:[#allocation8 + $0x68] sm:$0xff]
    %v92 = vld [vmem:[#allocation8 + $0x70] sm:$0xff]
    %v93 = vld [vmem:[#allocation8 + $0x78] sm:$0xff]
    %vm94 = vcmp.lt.u32.totalorder %v78, 2147483648
    %vm95 = vcmp.lt.u32.totalorder %v79, 2147483648
    %vm96 = vcmp.lt.u32.totalorder %v80, 2147483648
    %vm97 = vcmp.lt.u32.totalorder %v81, 2147483648
    %vm98 = vcmp.lt.u32.totalorder %v82, 2147483648
    %vm99 = vcmp.lt.u32.totalorder %v83, 2147483648
    %vm100 = vcmp.lt.u32.totalorder %v84, 2147483648
    %vm101 = vcmp.lt.u32.totalorder %v85, 2147483648
    %vm102 = vcmp.lt.u32.totalorder %v86, 2147483648
    %vm103 = vcmp.lt.u32.totalorder %v87, 2147483648
    %vm104 = vcmp.lt.u32.totalorder %v88, 2147483648
    %vm105 = vcmp.lt.u32.totalorder %v89, 2147483648
    %vm106 = vcmp.lt.u32.totalorder %v90, 2147483648
    %vm107 = vcmp.lt.u32.totalorder %v91, 2147483648
    %vm108 = vcmp.lt.u32.totalorder %v92, 2147483648
    %vm109 = vcmp.lt.u32.totalorder %v93, 2147483648
    %v110 = vsel %vm94, %v62, 0.0
    %v111 = vsel %vm95, %v63, 0.0
    %v112 = vsel %vm96, %v64, 0.0
    %v113 = vsel %vm97, %v65, 0.0
    %v114 = vsel %vm98, %v66, 0.0
    %v115 = vsel %vm99, %v67, 0.0
    %v116 = vsel %vm100, %v68, 0.0
    %v117 = vsel %vm101, %v69, 0.0
    %v118 = vsel %vm102, %v70, 0.0
    %v119 = vsel %vm103, %v71, 0.0
    %v120 = vsel %vm104, %v72, 0.0
    %v121 = vsel %vm105, %v73, 0.0
    %v122 = vsel %vm106, %v74, 0.0
    %v123 = vsel %vm107, %v75, 0.0
    %v124 = vsel %vm108, %v76, 0.0
    %v125 = vsel %vm109, %v77, 0.0
    %v126 = vld [vmem:[#allocation2] sm:$0xff]
    %v127 = vld [vmem:[#allocation3] sm:$0xff]
    %128 = vmatprep.subr.mxu0 0.0
    %129 = vmatpush1.msra.mxu0 %v110
    %130 = vmatprep.subr.mxu0 0.0
    %131 = vmatpush1.msra.mxu0 %v111
    %132 = vmatprep.subr.mxu0 0.0
    %133 = vmatpush1.msra.mxu0 %v112
    %134 = vmatprep.subr.mxu0 0.0
    %135 = vmatpush1.msra.mxu0 %v113
    %136 = vmatprep.subr.mxu0 0.0
    %137 = vmatpush1.msra.mxu0 %v114
    %138 = vmatprep.subr.mxu0 0.0
    %139 = vmatpush1.msra.mxu0 %v115
    %140 = vmatprep.subr.mxu0 0.0
    %141 = vmatpush1.msra.mxu0 %v116
    %142 = vmatprep.subr.mxu0 0.0
    %143 = vmatpush1.msra.mxu0 %v117
    %144 = vmatprep.subr.mxu0 0.0
    %145 = vmatpush1.msra.mxu0 %v118
    %146 = vmatprep.subr.mxu0 0.0
    %147 = vmatpush1.msra.mxu0 %v119
    %148 = vmatprep.subr.mxu0 0.0
    %149 = vmatpush1.msra.mxu0 %v120
    %150 = vmatprep.subr.mxu0 0.0
    %151 = vmatpush1.msra.mxu0 %v121
    %152 = vmatprep.subr.mxu0 0.0
    %153 = vmatpush1.msra.mxu0 %v122
    %154 = vmatprep.subr.mxu0 0.0
    %155 = vmatpush1.msra.mxu0 %v123
    %156 = vmatprep.subr.mxu0 0.0
    %157 = vmatpush1.msra.mxu0 %v124
    %158 = vmatprep.subr.mxu0 0.0
    %159 = vmatpush1.msra.mxu0 %v125
    %160 = vmatprep.subr.mxu0 0.0
    %161 = vmatpush1.msra.mxu0 0.0
    %162 = vmatprep.subr.mxu0 0.0
    %163 = vmatpush1.msra.mxu0 0.0
    %164 = vmatprep.subr.mxu0 0.0
    %165 = vmatpush1.msra.mxu0 0.0
    %166 = vmatprep.subr.mxu0 0.0
    %167 = vmatpush1.msra.mxu0 0.0
    %168 = vmatprep.subr.mxu0 0.0
    %169 = vmatpush1.msra.mxu0 0.0
    %170 = vmatprep.subr.mxu0 0.0
    %171 = vmatpush1.msra.mxu0 0.0
    %172 = vmatprep.subr.mxu0 0.0
    %173 = vmatpush1.msra.mxu0 0.0
    %174 = vmatprep.subr.mxu0 0.0
    %175 = vmatpush1.msra.mxu0 0.0
    %176 = vmatprep.subr.mxu0 0.0
    %177 = vmatpush1.msra.mxu0 0.0
    %178 = vmatprep.subr.mxu0 0.0
    %179 = vmatpush1.msra.mxu0 0.0
    %180 = vmatprep.subr.mxu0 0.0
    %181 = vmatpush1.msra.mxu0 0.0
    %182 = vmatprep.subr.mxu0 0.0
    %183 = vmatpush1.msra.mxu0 0.0
    %184 = vmatprep.subr.mxu0 0.0
    %185 = vmatpush1.msra.mxu0 0.0
    %186 = vmatprep.subr.mxu0 0.0
    %187 = vmatpush1.msra.mxu0 0.0
    %188 = vmatprep.subr.mxu0 0.0
    %189 = vmatpush1.msra.mxu0 0.0
    %190 = vmatprep.subr.mxu0 0.0
    %191 = vmatpush1.msra.mxu0 0.0
    %192 = vmatprep.mubr.f32.mxu0 0.0
    %193 = vmatmul.mubr.f32.gmra.mrb[0].mxu0 %v127
    %v194 = vpop.f32.mrb[0].mxu0
    %v195 = vadd.f32 0.0, %v194
    %v196 = vpop.f32.mrb[0].mxu0
    %197 = vdwg.mxu0
    %v198 = vadd.f32 %v126, %v195
    %199 = vst [vmem:[#allocation2] sm:$0xff] %v198
    // Predicated region
    $region34: #{tpu_custom_call.1} parent=1 // pred_check
      %p200 = pneg %p57
    $region35: #{tpu_custom_call.1} parent=1 // pred_check_branch
      %202 = sbr.rel (%p200) target = $region37
    $region36: #{tpu_custom_call.1} parent=1 // pred_region
      %v203 = vld [vmem:[#allocation2] sm:$0xff]
      %v204 = vmul.f32 %v203, 2.0
      %v205 = vld [vmem:[%s3] sm:$0x1]
      %v207 = vlaneseq
      %v208 = vshrl.u32 %v207, 7
      %v209 = vsub.s32 0, %v208
      %v210 = vrot.slane %v205, %v209
      %v212 = vadd.f32 %v204, %v210
      %213 = vst [vmem:[#allocation9] sm:$0xff] %v212
    $region37: #{tpu_custom_call.1} parent=1 // pred_fallthru
      _
    // Predicated region
    $region38: #{tpu_custom_call.1} parent=1 // pred_check
      _
    $region39: #{tpu_custom_call.1} parent=1 // pred_check_branch
      %215 = sbr.rel (0) target = $region41
    $region40: #{tpu_custom_call.1} parent=1 // pred_region
      %s217 = ssub.s32 128, 128
      %218 = vsyncadd [#allocation5], %s217
      %s220 = sshll.u32 [#allocation9], 4
      %s221 = int_to_ptr.vmem [resolvable:$true] %s220
      %223 = dma.vmem_to_hbm [thread:$0]  %s221, 128, %s4, [#allocation5]
    $region41: #{tpu_custom_call.1} parent=1 // pred_fallthru
      _
    // Predicated region
    $region42: #{tpu_custom_call.1} parent=1 // pred_check
      _
    $region43: #{tpu_custom_call.1} parent=1 // pred_check_branch
      %225 = sbr.rel (0) target = $region45
    $region44: #{tpu_custom_call.1} parent=1 // pred_region
      %226 = dma.done [#allocation5], 128
    $region45: #{tpu_custom_call.1} parent=1 // pred_fallthru
      _
    %227 = vsyncpa [#allocation4], 1
    %228 = vsyncpa [#allocation7], 1
    %229 = vsyncpa [#allocation5], 1

</llo_original>
